<compile_context>
chip_gen: v7x
topology: tpu7x:2x2x1
jax: 0.10.0
libtpu: 0.0.40
codegen_flags: <defaults>
</compile_context>

<pallas_src>
import jax
import jax.numpy as jnp
from jax.experimental import pallas as pl
from jax.experimental.pallas import tpu as pltpu


def outconv_kernel(x_ref, w_ref, b_ref, o_ref):
    # x_ref: (Cin, T)   pixels on lanes
    # w_ref: (Cout, Cin)
    # b_ref: (Cout, 1)
    # o_ref: (Cout, T)
    x = x_ref[...].astype(jnp.float32)
    w = w_ref[...].astype(jnp.float32)
    b = b_ref[...].astype(jnp.float32)
    cout, cin = w_ref.shape

    if cin <= 16 and cout <= 16:
        # Unrolled VPU broadcast-FMA: Cout*Cin multiplies/adds, fully hidden
        # under the input DMA on this HBM-bound op; avoids MXU push/pop latency.
        acc = b  # (Cout, 1) — broadcasts on first add
        for ci in range(cin):
            acc = acc + w[:, ci:ci + 1] * x[ci:ci + 1, :]
        o_ref[...] = acc.astype(o_ref.dtype)
    else:
        acc = jnp.dot(w, x, preferred_element_type=jnp.float32)
        o_ref[...] = (acc + b).astype(o_ref.dtype)


def out_conv(x_nchw, weight, bias, *, tile_p=2048):
    """1x1 Conv2d forward.  x_nchw: (N, C_in, H, W); weight: (C_out, C_in, 1, 1);
    bias: (C_out,).  Returns (N, C_out, H, W)."""
    N, Cin, H, W = x_nchw.shape
    Cout = weight.shape[0]
    HW = H * W

    # Free reshapes (contiguous, no data movement): stay in native NCHW.
    x = x_nchw.reshape(N, Cin, HW)
    w = weight.reshape(Cout, Cin)
    b = bias.reshape(Cout, 1)

    # Lane-dense pixel tile: either the full axis or a multiple of 128.
    if HW <= tile_p:
        tp = HW
    else:
        tp = max(128, (tile_p // 128) * 128)

    grid = (N, pl.cdiv(HW, tp))

    out = pl.pallas_call(
        outconv_kernel,
        out_shape=jax.ShapeDtypeStruct((N, Cout, HW), x_nchw.dtype),
        grid_spec=pltpu.PrefetchScalarGridSpec(
            num_scalar_prefetch=0,
            grid=grid,
            in_specs=[
                # x tile: squeeze batch dim, channels on sublanes, pixels on lanes.
                pl.BlockSpec((None, Cin, tp), lambda n, p: (n, 0, p)),
                # weight / bias: VMEM-resident across the whole grid.
                pl.BlockSpec((Cout, Cin), lambda n, p: (0, 0)),
                pl.BlockSpec((Cout, 1), lambda n, p: (0, 0)),
            ],
            out_specs=pl.BlockSpec((None, Cout, tp), lambda n, p: (n, 0, p)),
        ),
        compiler_params=pltpu.CompilerParams(
            dimension_semantics=("parallel", "parallel")),
    )(x, w, b)

    return out.reshape(N, Cout, H, W)


if __name__ == "__main__":
    # Small deterministic example consistent with OutConv(in_channels=4, out_channels=3)
    key = jax.random.PRNGKey(0)
    kx, kw, kb = jax.random.split(key, 3)

    N, Cin, Cout, Hs, Ws = 2, 4, 3, 16, 16
    x = jax.random.normal(kx, (N, Cin, Hs, Ws), dtype=jnp.float32)

    # Deterministic "Conv2d(kernel_size=1)"-shaped parameters.
    bound = 1.0 / jnp.sqrt(Cin * 1 * 1)
    weight = jax.random.uniform(kw, (Cout, Cin, 1, 1), jnp.float32, -bound, bound)
    bias = jax.random.uniform(kb, (Cout,), jnp.float32, -bound, bound)

    out = out_conv(x, weight, bias)
    out = jax.block_until_ready(out)

    # Reference check (plain JAX) for the 1x1 conv semantics.
    ref = jnp.einsum("nchw,oc->nohw", x, weight.reshape(Cout, Cin)) + bias[None, :, None, None]
    assert out.shape == (N, Cout, Hs, Ws)
    assert jnp.allclose(out, ref, atol=1e-5, rtol=1e-5)

    print("KERNEL_OK")
</pallas_src>

<mosaic_0001>
module attributes {stable_mosaic.version = 11 : i64} {
  func.func @outconv_kernel(%arg0: i32, %arg1: i32, %arg2: memref<1x4x256xf32, #tpu.memory_space<vmem>>, %arg3: memref<3x4xf32, #tpu.memory_space<vmem>>, %arg4: memref<3x1xf32, #tpu.memory_space<vmem>>, %arg5: memref<1x3x256xf32, #tpu.memory_space<vmem>>) attributes {dimension_semantics = [#tpu.dimension_semantics<parallel>, #tpu.dimension_semantics<parallel>], iteration_bounds = array<i64: 2, 1>, scalar_prefetch = 0 : i64, scratch_operands = 0 : i64, tpu.core_type = #tpu.core_type<tc>, window_params = [{transform_indices = @transform_0, window_bounds = array<i64: 1, 4, 256>}, {pipeline_mode = #tpu.pipeline_mode<synchronous>, transform_indices = @transform_1, window_bounds = array<i64: 3, 4>}, {pipeline_mode = #tpu.pipeline_mode<synchronous>, transform_indices = @transform_2, window_bounds = array<i64: 3, 1>}, {transform_indices = @transform_3, window_bounds = array<i64: 1, 3, 256>}]} {
    %c0 = arith.constant 0 : index
    %c0_0 = arith.constant 0 : index
    %c0_1 = arith.constant 0 : index
    %0 = vector.load %arg2[%c0, %c0_0, %c0_1] : memref<1x4x256xf32, #tpu.memory_space<vmem>>, vector<1x4x256xf32>
    %1 = vector.shape_cast %0 : vector<1x4x256xf32> to vector<4x256xf32>
    %c0_2 = arith.constant 0 : index
    %c0_3 = arith.constant 0 : index
    %2 = vector.load %arg3[%c0_2, %c0_3] : memref<3x4xf32, #tpu.memory_space<vmem>>, vector<3x4xf32>
    %c0_4 = arith.constant 0 : index
    %c0_5 = arith.constant 0 : index
    %3 = vector.load %arg4[%c0_4, %c0_5] : memref<3x1xf32, #tpu.memory_space<vmem>>, vector<3x1xf32>
    %4 = vector.extract_strided_slice %2 {offsets = [0, 0], sizes = [3, 1], strides = [1, 1]} : vector<3x4xf32> to vector<3x1xf32>
    %5 = vector.extract_strided_slice %1 {offsets = [0, 0], sizes = [1, 256], strides = [1, 1]} : vector<4x256xf32> to vector<1x256xf32>
    %6 = vector.broadcast %4 : vector<3x1xf32> to vector<3x256xf32>
    %7 = vector.broadcast %5 : vector<1x256xf32> to vector<3x256xf32>
    %8 = arith.mulf %6, %7 : vector<3x256xf32>
    %9 = vector.broadcast %3 : vector<3x1xf32> to vector<3x256xf32>
    %10 = arith.addf %9, %8 : vector<3x256xf32>
    %11 = vector.extract_strided_slice %2 {offsets = [0, 1], sizes = [3, 1], strides = [1, 1]} : vector<3x4xf32> to vector<3x1xf32>
    %12 = vector.extract_strided_slice %1 {offsets = [1, 0], sizes = [1, 256], strides = [1, 1]} : vector<4x256xf32> to vector<1x256xf32>
    %13 = vector.broadcast %11 : vector<3x1xf32> to vector<3x256xf32>
    %14 = vector.broadcast %12 : vector<1x256xf32> to vector<3x256xf32>
    %15 = arith.mulf %13, %14 : vector<3x256xf32>
    %16 = arith.addf %10, %15 : vector<3x256xf32>
    %17 = vector.extract_strided_slice %2 {offsets = [0, 2], sizes = [3, 1], strides = [1, 1]} : vector<3x4xf32> to vector<3x1xf32>
    %18 = vector.extract_strided_slice %1 {offsets = [2, 0], sizes = [1, 256], strides = [1, 1]} : vector<4x256xf32> to vector<1x256xf32>
    %19 = vector.broadcast %17 : vector<3x1xf32> to vector<3x256xf32>
    %20 = vector.broadcast %18 : vector<1x256xf32> to vector<3x256xf32>
    %21 = arith.mulf %19, %20 : vector<3x256xf32>
    %22 = arith.addf %16, %21 : vector<3x256xf32>
    %23 = vector.extract_strided_slice %2 {offsets = [0, 3], sizes = [3, 1], strides = [1, 1]} : vector<3x4xf32> to vector<3x1xf32>
    %24 = vector.extract_strided_slice %1 {offsets = [3, 0], sizes = [1, 256], strides = [1, 1]} : vector<4x256xf32> to vector<1x256xf32>
    %25 = vector.broadcast %23 : vector<3x1xf32> to vector<3x256xf32>
    %26 = vector.broadcast %24 : vector<1x256xf32> to vector<3x256xf32>
    %27 = arith.mulf %25, %26 : vector<3x256xf32>
    %28 = arith.addf %22, %27 : vector<3x256xf32>
    %c0_6 = arith.constant 0 : index
    %c0_7 = arith.constant 0 : index
    %c0_8 = arith.constant 0 : index
    %29 = vector.load %arg5[%c0_6, %c0_7, %c0_8] : memref<1x3x256xf32, #tpu.memory_space<vmem>>, vector<1x3x256xf32>
    %30 = vector.shape_cast %29 : vector<1x3x256xf32> to vector<3x256xf32>
    %31 = vector.shape_cast %28 : vector<3x256xf32> to vector<1x3x256xf32>
    tpu.vector_store %arg5[%c0_6, %c0_7, %c0_8], %31 {strides = array<i32>} : memref<1x3x256xf32, #tpu.memory_space<vmem>>, vector<1x3x256xf32>,
    return
  }
  func.func @transform_0(%arg0: i32, %arg1: i32) -> (i32, i32, i32) {
    %c0_i32 = arith.constant 0 : i32
    %c0_i32_0 = arith.constant 0 : i32
    return %arg0, %c0_i32, %arg1 : i32, i32, i32
  }
  func.func @transform_1(%arg0: i32, %arg1: i32) -> (i32, i32) {
    %c0_i32 = arith.constant 0 : i32
    %c0_i32_0 = arith.constant 0 : i32
    %c0_i32_1 = arith.constant 0 : i32
    return %c0_i32, %c0_i32_0 : i32, i32
  }
  func.func @transform_2(%arg0: i32, %arg1: i32) -> (i32, i32) {
    %c0_i32 = arith.constant 0 : i32
    %c0_i32_0 = arith.constant 0 : i32
    %c0_i32_1 = arith.constant 0 : i32
    return %c0_i32, %c0_i32_0 : i32, i32
  }
  func.func @transform_3(%arg0: i32, %arg1: i32) -> (i32, i32, i32) {
    %c0_i32 = arith.constant 0 : i32
    %c0_i32_0 = arith.constant 0 : i32
    return %arg0, %c0_i32, %arg1 : i32, i32, i32
  }
}

</mosaic_0001>

<llo_original>
// kernel: tpu_custom_call.1
$region0: #{tpu_custom_call.1}
  #allocation0 [shape = 'u32[]', space=smem, size = 0x4, offset = 0x4, fixed_abs, tag = 'smem constant byte address 0x4 - core index']
  #allocation1 [shape = 'u32[144,128]{1,0:T(1,128)}', space=vmem, size = 0x12000, scoped, tag = 'internal scratch']
  %s0 = inlined_call_operand.hbm [shape: f32[2,4,256], index: 0, kind: input, shape index: {}]
  %s1 = inlined_call_operand.vmem [shape: f32[3,4], index: 1, kind: input, shape index: {}]
  %s2 = inlined_call_operand.vmem [shape: f32[3,1], index: 2, kind: input, shape index: {}]
  %s3 = inlined_call_operand.vmem [shape: f32[2,3,256], index: 3, kind: output, shape index: {}]
  %s4 = sld [smem:[#allocation0]]
  $region49: #{tpu_custom_call.1} parent=0
    _
  %s6 = ssub.s32 1, %s4
  %s7 = scalar_select 0, %s6, %s4
  $region1: #{tpu_custom_call.1} parent=0
    #allocation2 [shape = 'u8[8192]{0}', space=vmem, size = 0x2000, scoped, tag = 'input window, operand 0']
    #allocation3 [shape = 's32[2]{0}', space=sflag, size = 0x8, scoped, tag = 'scoped memory for tpu_custom_call.1']
    %8 = vsyncpa [#allocation3], 0
    %s9 = scalar_lea.sflag [#allocation3], 1
    %10 = vsyncpa %s9, 0
    loop: start=0, step=1, limit=4
    $region2: #{tpu_custom_call.1} parent=1 // loop_pre_header
      _
    $region3: #{tpu_custom_call.1} parent=1 // loop_header
      %s12 = sphi 0, %s16
      %p13 = scmp.ge.s32.totalorder %s12, 4
      %s19 = sphi 0, %s31
      %s20 = sphi 0, %s27
      %s21 = sphi 0, %s19
      %s22 = sphi 0, %s20
      %s23 = sphi 0, %s21
      %s24 = sphi 0, %s22
      %s36 = sphi 0, %s38
      %s39 = sphi 0, %s36
      %s40 = sphi 0, %s39
      %s56 = sphi 0, %s40
      %s60 = sphi 0, %s60
      %s62 = sphi 0, %s60
      %s63 = sphi 0, %s62
      %s77 = sphi 0, %s63
      %s81 = sphi 0, %s81
      %s83 = sphi 0, %s81
      %s84 = sphi 0, %s83
      %s98 = sphi 0, %s84
      %s106 = sphi 0, %s108
      %s109 = sphi 0, %s106
      %s110 = sphi 0, %s109
      %s126 = sphi 0, %s110
    $region4: #{tpu_custom_call.1} parent=1 // loop_header_branch
      %15 = sbr.rel (%p13) target = $region8
    $region5: #{tpu_custom_call.1} parent=1 // loop_body
      %s17 = ssub.s32 %s12, 1
      %s18 = ssub.s32 %s12, 2
      %s25 = sadd.s32 1, %s20
      %p26 = scmp.ge.s32.totalorder %s25, 1
      %s27 = scalar_select %p26, 0, %s25
      %s28 = sadd.s32 1, %s19
      %s29 = scalar_select %p26, %s28, %s19
      %p30 = scmp.ge.s32.totalorder %s29, 2
      %s31 = scalar_select %p30, 0, %s29
      %s32 = ssub.s32 %s19, %s31
      %s33 = ssub.s32 %s20, %s27
      %s34 = sor.u32 %s32, %s33
      %p35 = scmp.eq.s32.totalorder %s34, 0
      %s37 = sadd.s32 %s36, 1
      %s38 = scalar_select %p35, %s36, %s37
      %p41 = pneg %p35
      %p42 = scmp.eq.s32.totalorder %s12, 1
      %p43 = por %p41, %p42
      %p44 = scmp.ne.s32.totalorder %s36, %s39
      %p45 = scmp.eq.s32.totalorder %s12, 0
      %p46 = por %p44, %p45
      %p47 = scmp.ne.s32.totalorder %s36, %s39
      %p48 = scmp.eq.s32.totalorder %s17, 1
      %p49 = por %p47, %p48
      %p50 = scmp.ne.s32.totalorder %s39, %s40
      %p51 = scmp.eq.s32.totalorder %s17, 0
      %p52 = por %p50, %p51
      %p53 = scmp.ne.s32.totalorder %s39, %s40
      %p54 = scmp.eq.s32.totalorder %s18, 1
      %p55 = por %p53, %p54
      %p57 = scmp.ne.s32.totalorder %s40, %s56
      %p58 = scmp.eq.s32.totalorder %s18, 0
      %p59 = por %p57, %p58
      %s61 = sadd.s32 %s60, 1
      %p64 = scmp.eq.s32.totalorder %s12, 1
      %p65 = scmp.ne.s32.totalorder %s60, %s62
      %p66 = scmp.eq.s32.totalorder %s12, 0
      %p67 = por %p65, %p66
      %p68 = scmp.ne.s32.totalorder %s60, %s62
      %p69 = scmp.eq.s32.totalorder %s17, 1
      %p70 = por %p68, %p69
      %p71 = scmp.ne.s32.totalorder %s62, %s63
      %p72 = scmp.eq.s32.totalorder %s17, 0
      %p73 = por %p71, %p72
      %p74 = scmp.ne.s32.totalorder %s62, %s63
      %p75 = scmp.eq.s32.totalorder %s18, 1
      %p76 = por %p74, %p75
      %p78 = scmp.ne.s32.totalorder %s63, %s77
      %p79 = scmp.eq.s32.totalorder %s18, 0
      %p80 = por %p78, %p79
      %s82 = sadd.s32 %s81, 1
      %p85 = scmp.eq.s32.totalorder %s12, 1
      %p86 = scmp.ne.s32.totalorder %s81, %s83
      %p87 = scmp.eq.s32.totalorder %s12, 0
      %p88 = por %p86, %p87
      %p89 = scmp.ne.s32.totalorder %s81, %s83
      %p90 = scmp.eq.s32.totalorder %s17, 1
      %p91 = por %p89, %p90
      %p92 = scmp.ne.s32.totalorder %s83, %s84
      %p93 = scmp.eq.s32.totalorder %s17, 0
      %p94 = por %p92, %p93
      %p95 = scmp.ne.s32.totalorder %s83, %s84
      %p96 = scmp.eq.s32.totalorder %s18, 1
      %p97 = por %p95, %p96
      %p99 = scmp.ne.s32.totalorder %s84, %s98
      %p100 = scmp.eq.s32.totalorder %s18, 0
      %p101 = por %p99, %p100
      %s102 = ssub.s32 %s19, %s31
      %s103 = ssub.s32 %s20, %s27
      %s104 = sor.u32 %s102, %s103
      %p105 = scmp.eq.s32.totalorder %s104, 0
      %s107 = sadd.s32 %s106, 1
      %s108 = scalar_select %p105, %s106, %s107
      %p111 = pneg %p105
      %p112 = scmp.eq.s32.totalorder %s12, 1
      %p113 = por %p111, %p112
      %p114 = scmp.ne.s32.totalorder %s106, %s109
      %p115 = scmp.eq.s32.totalorder %s12, 0
      %p116 = por %p114, %p115
      %p117 = scmp.ne.s32.totalorder %s106, %s109
      %p118 = scmp.eq.s32.totalorder %s17, 1
      %p119 = por %p117, %p118
      %p120 = scmp.ne.s32.totalorder %s109, %s110
      %p121 = scmp.eq.s32.totalorder %s17, 0
      %p122 = por %p120, %p121
      %p123 = scmp.ne.s32.totalorder %s109, %s110
      %p124 = scmp.eq.s32.totalorder %s18, 1
      %p125 = por %p123, %p124
      %p127 = scmp.ne.s32.totalorder %s110, %s126
      %p128 = scmp.eq.s32.totalorder %s18, 0
      %p129 = por %p127, %p128
      %p130 = scmp.le.s32.totalorder 1, %s12
      %p131 = scmp.lt.s32.totalorder %s12, 3
      %p132 = pnand %p130, %p131
      %p133 = pneg %p132
      // Predicated region
      $region9: #{tpu_custom_call.1} parent=5 // pred_check
        _
      $region10: #{tpu_custom_call.1} parent=5 // pred_check_branch
        %135 = sbr.rel (%p132) target = $region12
      $region11: #{tpu_custom_call.1} parent=5 // pred_region
        %s136 = ssub.s32 %s12, 1
        // Predicated region
        $region13: #{tpu_custom_call.1} parent=11 // pred_check
          %p137 = pneg %p73
        $region14: #{tpu_custom_call.1} parent=11 // pred_check_branch
          %139 = sbr.rel (%p137) target = $region16
        $region15: #{tpu_custom_call.1} parent=11 // pred_region
          _
        $region16: #{tpu_custom_call.1} parent=11 // pred_fallthru
          _
        // Predicated region
        $region17: #{tpu_custom_call.1} parent=11 // pred_check
          %p140 = pneg %p94
        $region18: #{tpu_custom_call.1} parent=11 // pred_check_branch
          %142 = sbr.rel (%p140) target = $region20
        $region19: #{tpu_custom_call.1} parent=11 // pred_region
          _
        $region20: #{tpu_custom_call.1} parent=11 // pred_fallthru
          _
      $region12: #{tpu_custom_call.1} parent=5 // pred_fallthru
        _
      %p143 = scmp.lt.s32.totalorder %s12, 2
      // Predicated region
      $region21: #{tpu_custom_call.1} parent=5 // pred_check
        %p144 = pneg %p143
      $region22: #{tpu_custom_call.1} parent=5 // pred_check_branch
        %146 = sbr.rel (%p144) target = $region24
      $region23: #{tpu_custom_call.1} parent=5 // pred_region
        // Predicated region
        $region25: #{tpu_custom_call.1} parent=23 // pred_check
          %p147 = pneg %p46
        $region26: #{tpu_custom_call.1} parent=23 // pred_check_branch
          %149 = sbr.rel (%p147) target = $region28
        $region27: #{tpu_custom_call.1} parent=23 // pred_region
          %s150 = sand.u32 %s36, 1
          %s151 = scalar_lea.sflag [#allocation3], %s150
          %s152 = sand.u32 %s36, 1
          %s153 = smul.addr %s152, 8
          %s154 = scalar_lea.vmem [#allocation2], %s153
          %s155 = smul.u32 2, %s20
          %s157 = ssub.s32 128, 128
          %158 = vsyncadd %s151, %s157
          %s159 = smul.addr %s19, 2
          %s160 = sadd.s32 %s155, %s159
          %s161 = smul.addr %s160, 64
          %s162 = scalar_lea.hbm %s0, %s161
          %s164 = sshll.u32 %s154, 4
          %s165 = int_to_ptr.vmem [resolvable:$true] %s164
          %167 = dma.hbm_to_vmem [thread:$0]  %s162, 128, %s165, %s151
        $region28: #{tpu_custom_call.1} parent=23 // pred_fallthru
          _
      $region24: #{tpu_custom_call.1} parent=5 // pred_fallthru
        _
      %p168 = scmp.le.s32.totalorder 1, %s12
      %p169 = scmp.lt.s32.totalorder %s12, 3
      %p170 = pnand %p168, %p169
      %p171 = pneg %p170
      // Predicated region
      $region29: #{tpu_custom_call.1} parent=5 // pred_check
        _
      $region30: #{tpu_custom_call.1} parent=5 // pred_check_branch
        %173 = sbr.rel (%p170) target = $region32
      $region31: #{tpu_custom_call.1} parent=5 // pred_region
        %s174 = ssub.s32 %s12, 1
        %s175 = sand.u32 %s39, 1
        %s176 = scalar_lea.sflag [#allocation3], %s175
        %s177 = sand.u32 %s39, 1
        %s178 = smul.addr %s177, 8
        %s179 = scalar_lea.vmem [#allocation2], %s178
        // Predicated region
        $region33: #{tpu_custom_call.1} parent=31 // pred_check
          %p180 = pneg %p52
        $region34: #{tpu_custom_call.1} parent=31 // pred_check_branch
          %182 = sbr.rel (%p180) target = $region36
        $region35: #{tpu_custom_call.1} parent=31 // pred_region
          %183 = dma.done %s176, 128
        $region36: #{tpu_custom_call.1} parent=31 // pred_fallthru
          _
        %s184 = sand.u32 %s39, 1
        %s185 = scalar_lea.sflag [#allocation3], %s184
        %s186 = sand.u32 %s39, 1
        %s187 = smul.addr %s186, 8
        %s188 = scalar_lea.vmem [#allocation2], %s187
        %p189 = pneg %p52
        %p190 = pneg %p49
        %p191 = pneg %p73
        %p192 = pneg %p70
        %p193 = pneg %p94
        %p194 = pneg %p91
        %p195 = pneg %p122
        %p196 = pneg %p119
        %s197 = smul.u32 2, %s22
        %p198 = scmp.lt.s32.totalorder %s21, 1
        %s199 = scalar_select %p198, %s21, 1
        %p200 = scmp.lt.s32.totalorder %s197, 1
        %s201 = scalar_select %p200, %s197, 1
        %s202 = smul.addr %s199, 2
        %s203 = sadd.s32 %s201, %s202
        %s204 = smul.addr %s203, 4
        %s205 = scalar_lea.vmem %s3, %s204
        %s206 = smul.u32 2, %s22
        %s207 = smul.u32 2, %s22
        %p208 = scmp.lt.s32.totalorder %s21, 1
        %s209 = scalar_select %p208, %s21, 1
        %p210 = scmp.lt.s32.totalorder %s207, 1
        %s211 = scalar_select %p210, %s207, 1
        %s212 = smul.addr %s209, 2
        %s213 = sadd.s32 %s211, %s212
        %s214 = smul.addr %s213, 4
        %s215 = scalar_lea.vmem %s3, %s214
        %s216 = smul.u32 2, %s22
        %v217 = vld [vmem:[%s179] sm:$0xff]
        %v218 = vld [vmem:[%s1] sm:$0x7]
        %v219 = vld [vmem:[%s2] sm:$0x7]
        %221 = vset.pattern.permute.xlu0 0
        %222 = vperm.xlu0 %221, %v218
        %v223 = vpop.permute.xlu0 %222
        %v226 = vlaneseq
        %v227 = vshrl.u32 %v226, 7
        %v228 = vsub.s32 0, %v227
        %v229 = vrot.slane %v217, %v228
        %v230 = vlaneseq
        %v231 = vshrl.u32 %v230, 7
        %v232 = vsub.s32 4, %v231
        %v233 = vrot.slane %v217, %v232
        %v236 = vlaneseq
        %v237 = vshrl.u32 %v236, 7
        %v238 = vsub.s32 0, %v237
        %v239 = vrot.slane %v229, %v238
        %v240 = vlaneseq
        %v241 = vshrl.u32 %v240, 7
        %v242 = vsub.s32 0, %v241
        %v243 = vrot.slane %v233, %v242
        %v244 = vmul.f32 %v223, %v239
        %v245 = vmul.f32 %v223, %v243
        %247 = vset.pattern.permute.xlu0 0
        %248 = vperm.xlu0 %247, %v219
        %v249 = vpop.permute.xlu0 %248
        %v251 = vadd.f32 %v249, %v244
        %v252 = vadd.f32 %v249, %v245
        %253 = vset.pattern.permute.xlu0 1
        %254 = vperm.xlu0 %253, %v218
        %v255 = vpop.permute.xlu0 %254
        %v257 = vlaneseq
        %v258 = vshrl.u32 %v257, 7
        %v259 = vsub.s32 1, %v258
        %v260 = vrot.slane %v217, %v259
        %v261 = vlaneseq
        %v262 = vshrl.u32 %v261, 7
        %v263 = vsub.s32 5, %v262
        %v264 = vrot.slane %v217, %v263
        %v267 = vlaneseq
        %v268 = vshrl.u32 %v267, 7
        %v269 = vsub.s32 1, %v268
        %v270 = vrot.slane %v260, %v269
        %v271 = vlaneseq
        %v272 = vshrl.u32 %v271, 7
        %v273 = vsub.s32 1, %v272
        %v274 = vrot.slane %v264, %v273
        %v275 = vmul.f32 %v255, %v270
        %v276 = vmul.f32 %v255, %v274
        %v277 = vadd.f32 %v251, %v275
        %v278 = vadd.f32 %v252, %v276
        %279 = vset.pattern.permute.xlu0 2
        %280 = vperm.xlu0 %279, %v218
        %v281 = vpop.permute.xlu0 %280
        %v283 = vlaneseq
        %v284 = vshrl.u32 %v283, 7
        %v285 = vsub.s32 2, %v284
        %v286 = vrot.slane %v217, %v285
        %v287 = vlaneseq
        %v288 = vshrl.u32 %v287, 7
        %v289 = vsub.s32 6, %v288
        %v290 = vrot.slane %v217, %v289
        %v293 = vlaneseq
        %v294 = vshrl.u32 %v293, 7
        %v295 = vsub.s32 2, %v294
        %v296 = vrot.slane %v286, %v295
        %v297 = vlaneseq
        %v298 = vshrl.u32 %v297, 7
        %v299 = vsub.s32 2, %v298
        %v300 = vrot.slane %v290, %v299
        %v301 = vmul.f32 %v281, %v296
        %v302 = vmul.f32 %v281, %v300
        %v303 = vadd.f32 %v277, %v301
        %v304 = vadd.f32 %v278, %v302
        %305 = vset.pattern.permute.xlu0 3
        %306 = vperm.xlu0 %305, %v218
        %v307 = vpop.permute.xlu0 %306
        %v309 = vlaneseq
        %v310 = vshrl.u32 %v309, 7
        %v311 = vsub.s32 3, %v310
        %v312 = vrot.slane %v217, %v311
        %v313 = vlaneseq
        %v314 = vshrl.u32 %v313, 7
        %v315 = vsub.s32 7, %v314
        %v316 = vrot.slane %v217, %v315
        %v319 = vlaneseq
        %v320 = vshrl.u32 %v319, 7
        %v321 = vsub.s32 3, %v320
        %v322 = vrot.slane %v312, %v321
        %v323 = vlaneseq
        %v324 = vshrl.u32 %v323, 7
        %v325 = vsub.s32 3, %v324
        %v326 = vrot.slane %v316, %v325
        %v327 = vmul.f32 %v307, %v322
        %v328 = vmul.f32 %v307, %v326
        %v329 = vadd.f32 %v303, %v327
        %v330 = vadd.f32 %v304, %v328
        %v333 = vcombine.low %v329, %v330
        %335 = vst [vmem:[%s215] sm:$0x77] %v333
        %s336 = smul.u32 2, %s22
        %p337 = scmp.lt.s32.totalorder %s21, 1
        %s338 = scalar_select %p337, %s21, 1
        %p339 = scmp.lt.s32.totalorder %s336, 1
        %s340 = scalar_select %p339, %s336, 1
        %s341 = smul.addr %s338, 2
        %s342 = sadd.s32 %s340, %s341
        %s343 = smul.addr %s342, 4
        %s344 = scalar_lea.vmem %s3, %s343
        // Predicated region
        $region37: #{tpu_custom_call.1} parent=31 // pred_check
          %p345 = pneg %p119
        $region38: #{tpu_custom_call.1} parent=31 // pred_check_branch
          %347 = sbr.rel (%p345) target = $region40
        $region39: #{tpu_custom_call.1} parent=31 // pred_region
          %s348 = smul.u32 2, %s22
        $region40: #{tpu_custom_call.1} parent=31 // pred_fallthru
          _
      $region32: #{tpu_custom_call.1} parent=5 // pred_fallthru
        _
      %p349 = scmp.le.s32.totalorder 2, %s12
      // Predicated region
      $region41: #{tpu_custom_call.1} parent=5 // pred_check
        %p350 = pneg %p349
      $region42: #{tpu_custom_call.1} parent=5 // pred_check_branch
        %352 = sbr.rel (%p350) target = $region44
      $region43: #{tpu_custom_call.1} parent=5 // pred_region
        %s353 = ssub.s32 %s12, 2
        // Predicated region
        $region45: #{tpu_custom_call.1} parent=43 // pred_check
          %p354 = pneg %p125
        $region46: #{tpu_custom_call.1} parent=43 // pred_check_branch
          %356 = sbr.rel (%p354) target = $region48
        $region47: #{tpu_custom_call.1} parent=43 // pred_region
          %s357 = smul.u32 2, %s24
          %p358 = scmp.lt.s32.totalorder %s23, 1
          %s359 = scalar_select %p358, %s23, 1
          %p360 = scmp.lt.s32.totalorder %s357, 1
          %s361 = scalar_select %p360, %s357, 1
          %s362 = smul.addr %s359, 2
          %s363 = sadd.s32 %s361, %s362
          %s364 = smul.addr %s363, 4
          %s365 = scalar_lea.vmem %s3, %s364
        $region48: #{tpu_custom_call.1} parent=43 // pred_fallthru
          _
      $region44: #{tpu_custom_call.1} parent=5 // pred_fallthru
        _
    $region6: #{tpu_custom_call.1} parent=1 // loop_footer
      %s16 = sadd.s32 1, %s12
    $region7: #{tpu_custom_call.1} parent=1 // loop_footer_branch
      %11 = sbr.rel target = $region3
    $region8: #{tpu_custom_call.1} parent=1 // loop_exit
      _
    %366 = vsyncpa [#allocation3], 1
    %s367 = scalar_lea.sflag [#allocation3], 1
    %368 = vsyncpa %s367, 1

</llo_original>
